<compile_context>
chip_gen: v7x
topology: tpu7x:2x2x1
jax: 0.10.0
libtpu: 0.0.40
codegen_flags: <defaults>
</compile_context>

<pallas_src>
import jax
import jax.numpy as jnp
from jax.experimental import pallas as pl
from jax.experimental.pallas import tpu as pltpu


def _default_target_bytes():
    """Per-grid-step block budget: ~2 MiB on v7x (64 MiB VMEM / 2 TCs),
    ~4 MiB on v5e/v6e (128 MiB VMEM)."""
    try:
        vmem = pltpu.get_tpu_info().vmem_capacity_bytes
    except Exception:
        vmem = 64 << 20
    return (4 << 20) if vmem >= (100 << 20) else (2 << 20)


def _pick_row_tile(H, WC, itemsize, target_bytes):
    """Largest TH with TH | H and (TH % 8 == 0 or TH == H) fitting the budget."""
    if H * WC * itemsize <= target_bytes:
        return H
    cands = [t for t in range(8, H, 8) if H % t == 0]
    if not cands:
        # No legal sub-tile (block dims must be %8 or full-extent); fall back
        # to the whole image -- vmem_limit below is sized from the real need.
        return H
    fit = [t for t in cands if t * WC * itemsize <= target_bytes]
    return max(fit) if fit else min(cands)


def _pick_batch_tile(B, TH, WC, itemsize, target_bytes, max_tb=8):
    per = TH * WC * itemsize
    best = 1
    for tb in range(1, min(B, max_tb) + 1):
        if B % tb == 0 and tb * per <= target_bytes:
            best = tb
    return best


def _gelu_exact(x):
    """Exact (erf-based) GELU, matching torch.nn.GELU() / jax.nn.gelu(approximate=False).
    erf via Abramowitz & Stegun 7.1.26 (|err| <= 1.5e-7): only exp/mul/add/div,
    so it lowers on every TPU generation (exp and the divide go to the EUP)."""
    z = x * 0.7071067811865476
    az = jnp.abs(z)
    t = 1.0 / (1.0 + 0.3275911 * az)
    poly = t * (0.254829592 + t * (-0.284496736 + t * (1.421413741
               + t * (-1.453152027 + t * 1.061405429))))
    erf_abs = 1.0 - poly * jnp.exp(-az * az)
    erf = jnp.where(z < 0, -erf_abs, erf_abs)
    return 0.5 * x * (1.0 + erf)


def dwconv_pallas(x, weight, bias, H, W, *, fuse_gelu=False, row_tile=None,
                  batch_tile=None, target_block_bytes=None):
    """Depthwise 3x3 / stride 1 / pad 1 conv (+ optional fused exact GELU).
    x: (B, N, C) with N == H*W; weight: (C, 1, 3, 3); bias: (C,). -> (B, N, C)."""
    B, N, C = x.shape
    assert N == H * W, f"N={N} must equal H*W={H * W}"
    WC = W * C
    itemsize = jnp.dtype(x.dtype).itemsize

    if target_block_bytes is None:
        target_block_bytes = _default_target_bytes()

    TH = row_tile if row_tile is not None else _pick_row_tile(H, WC, itemsize, target_block_bytes)
    assert H % TH == 0, f"row_tile {TH} must divide H={H}"
    assert TH % 8 == 0 or TH == H, f"row_tile {TH} must be a multiple of 8 or == H"
    TB = batch_tile if batch_tile is not None else _pick_batch_tile(
        B, TH, WC, itemsize, target_block_bytes)
    assert B % TB == 0, f"batch_tile {TB} must divide B={B}"

    # v7x has 2 TensorCores per chip: expose >= 2 grid steps when possible.
    if (B // TB) * (H // TH) < 2:
        if TB > 1 and batch_tile is None:
            TB = next(d for d in range(TB // 2, 0, -1) if B % d == 0)
        elif row_tile is None:
            cands = [t for t in range(8, H, 8) if H % t == 0]
            if cands:
                TH = max(cands)
    nB, nT = B // TB, H // TH

    aligned = (C % 128 == 0)            # true for all real MiT hidden dims
    WCB = WC + 2 * C if aligned else WC  # aligned path gets a W-halo in lanes

    # ---------------- cheap host-side prep (no full-tensor pad) -------------
    x3 = x.reshape(B, H, WC)            # metadata-only: rows are lane-dense

    if nT == 1:                         # common case: no vertical halo needed
        halo = jnp.zeros((B, 1, 2, WC), x.dtype)
    else:                               # per-tile halo rows, zero at the border
        zero_row = jnp.zeros((B, 1, WC), x.dtype)
        top = jnp.concatenate([zero_row, x3[:, TH - 1:H - 1:TH, :]], axis=1)
        bot = jnp.concatenate([x3[:, TH:H:TH, :], zero_row], axis=1)
        halo = jnp.stack([top, bot], axis=2)              # (B, nT, 2, WC)

    # Un-killed lane-tiled taps (9, W*C) and lane-tiled bias (1, W*C), f32.
    w33c = jnp.transpose(weight[:, 0, :, :].astype(jnp.float32), (1, 2, 0))  # (3,3,C)
    taps = jnp.tile(w33c[:, :, None, :], (1, 1, W, 1)).reshape(9, WC)
    bvec = jnp.tile(bias.astype(jnp.float32), W).reshape(1, WC)

    # ---------------- kernel -------------------------------------------------
    def kernel(x_ref, halo_ref, taps_ref, bias_ref, o_ref, xbuf):
        # x_ref   : (TB, TH, WC)   input slab (input dtype)
        # halo_ref: (TB, 1, 2, WC) [row above tile, row below tile] (border->0)
        # taps_ref: (9, WC) f32    lane-tiled, un-killed taps
        # bias_ref: (1, WC) f32
        # o_ref   : (TB, TH, WC)
        # xbuf    : VMEM (TH+2, WCB) f32; aligned path adds a C-wide zero
        #           stripe on each side so W-shifts are lane-aligned slices.
        tap = [taps_ref[pl.ds(t, 1), :] for t in range(9)]        # hoisted loads
        bias_full = jnp.broadcast_to(bias_ref[...], (TH, WC))     # hoisted

        col0 = C if aligned else 0
        if aligned:
            zstripe = jnp.zeros((TH + 2, C), jnp.float32)
            xbuf[pl.ds(0, TH + 2), pl.ds(0, C)] = zstripe
            xbuf[pl.ds(0, TH + 2), pl.ds(C + WC, C)] = zstripe
        else:
            lane = jax.lax.broadcasted_iota(jnp.int32, (1, WC), 1)
            m_first = (lane >= C).astype(jnp.float32)             # col 0 has no w-1
            m_last = (lane < (W - 1) * C).astype(jnp.float32)     # col W-1 has no w+1

        for b in range(TB):                                       # static unroll
            hrow = halo_ref[b, 0].astype(jnp.float32)             # (2, WC)
            xbuf[pl.ds(0, 1), pl.ds(col0, WC)] = hrow[0:1, :]
            xbuf[pl.ds(1, TH), pl.ds(col0, WC)] = x_ref[b].astype(jnp.float32)
            xbuf[pl.ds(TH + 1, 1), pl.ds(col0, WC)] = hrow[1:2, :]

            if aligned:
                # 9 lane-aligned slab reads; no rolls, no kill masks.
                acc = bias_full
                for di in range(3):
                    for dj in range(3):
                        rows = xbuf[pl.ds(di, TH), pl.ds(dj * C, WC)]
                        acc = acc + rows * tap[di * 3 + dj]
            else:
                # Linearity: 3 slab reads, per-column partial sums, then only
                # 2 lane rolls total (taps are W-periodic so the roll commutes);
                # border kill masks are applied post-roll.
                up = xbuf[pl.ds(0, TH), :]
                mid = xbuf[pl.ds(1, TH), :]
                dn = xbuf[pl.ds(2, TH), :]
                p0 = up * tap[0] + mid * tap[3] + dn * tap[6]     # reads col w-1
                p1 = up * tap[1] + mid * tap[4] + dn * tap[7]     # reads col w
                p2 = up * tap[2] + mid * tap[5] + dn * tap[8]     # reads col w+1
                acc = (bias_full + p1
                       + m_first * pltpu.roll(p0, shift=C, axis=1)
                       + m_last * pltpu.roll(p2, shift=WC - C, axis=1))

            if fuse_gelu:
                acc = _gelu_exact(acc)
            o_ref[b] = acc.astype(o_ref.dtype)

    # VMEM request: measured need + small headroom (don't over-ask: v7x has
    # only 64 MiB physical VMEM shared by 2 TensorCores).
    blk = TB * TH * WC * itemsize
    halo_b = TB * 2 * WC * itemsize
    params_b = 10 * WC * 4
    scratch_b = (TH + 2) * WCB * 4
    needed = 2 * (blk + halo_b + params_b) + 2 * blk + scratch_b
    vmem_limit = int(min(max(needed + (2 << 20), 8 << 20), 56 << 20))

    out = pl.pallas_call(
        kernel,
        out_shape=jax.ShapeDtypeStruct((B, H, WC), x.dtype),
        grid_spec=pltpu.PrefetchScalarGridSpec(
            num_scalar_prefetch=0,
            grid=(nB, nT),
            in_specs=[
                pl.BlockSpec((TB, TH, WC), lambda b, i: (b, i, 0)),
                pl.BlockSpec((TB, 1, 2, WC), lambda b, i: (b, i, 0, 0)),
                pl.BlockSpec((9, WC), lambda b, i: (0, 0)),
                pl.BlockSpec((1, WC), lambda b, i: (0, 0)),
            ],
            out_specs=pl.BlockSpec((TB, TH, WC), lambda b, i: (b, i, 0)),
            scratch_shapes=[pltpu.VMEM((TH + 2, WCB), jnp.float32)],
        ),
        compiler_params=pltpu.CompilerParams(
            dimension_semantics=("parallel", "parallel"),
            vmem_limit_bytes=vmem_limit),
    )(x3, halo, taps, bvec)

    return out.reshape(B, N, C)


def _reference(x, weight, bias, H, W, fuse_gelu=False):
    # Pure-JAX reference mirroring the PyTorch forward (NCHW depthwise conv),
    # optionally followed by the exact GELU used in Mlp.
    B, N, C = x.shape
    xf = x.astype(jnp.float32)
    x_nchw = jnp.transpose(xf, (0, 2, 1)).reshape(B, C, H, W)
    y = jax.lax.conv_general_dilated(
        x_nchw, weight, window_strides=(1, 1), padding=((1, 1), (1, 1)),
        dimension_numbers=("NCHW", "OIHW", "NCHW"), feature_group_count=C)
    y = y + bias.reshape(1, C, 1, 1)
    y = jnp.transpose(y.reshape(B, C, N), (0, 2, 1))
    if fuse_gelu:
        y = jax.nn.gelu(y, approximate=False)
    return y


if __name__ == "__main__":
    key = jax.random.PRNGKey(0)
    k1, k2, k3, k4, k5, k6 = jax.random.split(key, 6)

    # ---- case 1: C not a multiple of 128 -> roll (XLU) path -----------------
    B, C, Hd, Wd = 2, 32, 16, 16
    N = Hd * Wd
    x = jax.random.normal(k1, (B, N, C), dtype=jnp.float32)
    weight = 0.1 * jax.random.normal(k2, (C, 1, 3, 3), dtype=jnp.float32)
    bias = 0.1 * jax.random.normal(k3, (C,), dtype=jnp.float32)

    y = dwconv_pallas(x, weight, bias, Hd, Wd)
    jax.block_until_ready(y)
    y_ref = _reference(x, weight, bias, Hd, Wd)
    assert y.shape == (B, N, C)
    assert jnp.allclose(y, y_ref, atol=1e-5, rtol=1e-5)

    # fused GELU epilogue (Mlp: dwconv -> insert_cls -> GELU; the wt_token
    # row's GELU is the caller's responsibility).
    y_g = dwconv_pallas(x, weight, bias, Hd, Wd, fuse_gelu=True)
    jax.block_until_ready(y_g)
    y_g_ref = _reference(x, weight, bias, Hd, Wd, fuse_gelu=True)
    assert jnp.allclose(y_g, y_g_ref, atol=2e-5, rtol=2e-5)

    # forced row/batch tiling: exercises the halo + batch-blocked path.
    y_t = dwconv_pallas(x, weight, bias, Hd, Wd, row_tile=8, batch_tile=2)
    jax.block_until_ready(y_t)
    assert jnp.allclose(y_t, y_ref, atol=1e-5, rtol=1e-5)

    # bf16 I/O path (f32 accumulation in-kernel).
    xb = x.astype(jnp.bfloat16)
    y_b = dwconv_pallas(xb, weight, bias, Hd, Wd, fuse_gelu=True)
    jax.block_until_ready(y_b)
    y_b_ref = _reference(xb, weight, bias, Hd, Wd, fuse_gelu=True)
    assert jnp.allclose(y_b.astype(jnp.float32), y_b_ref, atol=2e-2, rtol=2e-2)

    # ---- case 2: C % 128 == 0 (real MiT hidden dims) -> aligned-slice path --
    C2, H2, W2 = 128, 16, 8
    N2 = H2 * W2
    x2 = jax.random.normal(k4, (B, N2, C2), dtype=jnp.float32)
    w2 = 0.1 * jax.random.normal(k5, (C2, 1, 3, 3), dtype=jnp.float32)
    b2 = 0.1 * jax.random.normal(k6, (C2,), dtype=jnp.float32)
    y2 = dwconv_pallas(x2, w2, b2, H2, W2, fuse_gelu=True, row_tile=8, batch_tile=1)
    jax.block_until_ready(y2)
    y2_ref = _reference(x2, w2, b2, H2, W2, fuse_gelu=True)
    assert jnp.allclose(y2, y2_ref, atol=2e-5, rtol=2e-5)

    print("KERNEL_OK")
</pallas_src>

<mosaic_0001>
module attributes {stable_mosaic.version = 11 : i64} {
  func.func @kernel(%arg0: i32, %arg1: i32, %arg2: memref<1x16x512xf32, #tpu.memory_space<vmem>>, %arg3: memref<1x1x2x512xf32, #tpu.memory_space<vmem>>, %arg4: memref<9x512xf32, #tpu.memory_space<vmem>>, %arg5: memref<1x512xf32, #tpu.memory_space<vmem>>, %arg6: memref<1x16x512xf32, #tpu.memory_space<vmem>>, %arg7: memref<18x512xf32, #tpu.memory_space<vmem>>) attributes {dimension_semantics = [#tpu.dimension_semantics<parallel>, #tpu.dimension_semantics<parallel>], iteration_bounds = array<i64: 2, 1>, scalar_prefetch = 0 : i64, scratch_operands = 1 : i64, tpu.core_type = #tpu.core_type<tc>, window_params = [{transform_indices = @transform_0, window_bounds = array<i64: 1, 16, 512>}, {transform_indices = @transform_1, window_bounds = array<i64: 1, 1, 2, 512>}, {pipeline_mode = #tpu.pipeline_mode<synchronous>, transform_indices = @transform_2, window_bounds = array<i64: 9, 512>}, {pipeline_mode = #tpu.pipeline_mode<synchronous>, transform_indices = @transform_3, window_bounds = array<i64: 1, 512>}, {transform_indices = @transform_4, window_bounds = array<i64: 1, 16, 512>}]} {
    %c0 = arith.constant 0 : index
    %c0_0 = arith.constant 0 : index
    %0 = vector.load %arg4[%c0, %c0_0] : memref<9x512xf32, #tpu.memory_space<vmem>>, vector<1x512xf32>
    %c1 = arith.constant 1 : index
    %c0_1 = arith.constant 0 : index
    %1 = vector.load %arg4[%c1, %c0_1] : memref<9x512xf32, #tpu.memory_space<vmem>>, vector<1x512xf32>
    %c2 = arith.constant 2 : index
    %c0_2 = arith.constant 0 : index
    %2 = vector.load %arg4[%c2, %c0_2] : memref<9x512xf32, #tpu.memory_space<vmem>>, vector<1x512xf32>
    %c3 = arith.constant 3 : index
    %c0_3 = arith.constant 0 : index
    %3 = vector.load %arg4[%c3, %c0_3] : memref<9x512xf32, #tpu.memory_space<vmem>>, vector<1x512xf32>
    %c4 = arith.constant 4 : index
    %c0_4 = arith.constant 0 : index
    %4 = vector.load %arg4[%c4, %c0_4] : memref<9x512xf32, #tpu.memory_space<vmem>>, vector<1x512xf32>
    %c5 = arith.constant 5 : index
    %c0_5 = arith.constant 0 : index
    %5 = vector.load %arg4[%c5, %c0_5] : memref<9x512xf32, #tpu.memory_space<vmem>>, vector<1x512xf32>
    %c6 = arith.constant 6 : index
    %c0_6 = arith.constant 0 : index
    %6 = vector.load %arg4[%c6, %c0_6] : memref<9x512xf32, #tpu.memory_space<vmem>>, vector<1x512xf32>
    %c7 = arith.constant 7 : index
    %c0_7 = arith.constant 0 : index
    %7 = vector.load %arg4[%c7, %c0_7] : memref<9x512xf32, #tpu.memory_space<vmem>>, vector<1x512xf32>
    %c8 = arith.constant 8 : index
    %c0_8 = arith.constant 0 : index
    %8 = vector.load %arg4[%c8, %c0_8] : memref<9x512xf32, #tpu.memory_space<vmem>>, vector<1x512xf32>
    %c0_9 = arith.constant 0 : index
    %c0_10 = arith.constant 0 : index
    %9 = vector.load %arg5[%c0_9, %c0_10] : memref<1x512xf32, #tpu.memory_space<vmem>>, vector<1x512xf32>
    %10 = vector.shape_cast %9 : vector<1x512xf32> to vector<1x512xf32>
    %11 = vector.broadcast %10 : vector<1x512xf32> to vector<16x512xf32>
    %12 = tpu.iota {dimensions = array<i32: 1>} : vector<1x512xi32>
    %c32_i32 = arith.constant 32 : i32
    %13 = vector.broadcast %c32_i32 : i32 to vector<1x512xi32>
    %14 = arith.cmpi sge, %12, %13 : vector<1x512xi32>
    %15 = arith.extui %14 : vector<1x512xi1> to vector<1x512xi32>
    %16 = arith.sitofp %15 : vector<1x512xi32> to vector<1x512xf32>
    %c480_i32 = arith.constant 480 : i32
    %17 = vector.broadcast %c480_i32 : i32 to vector<1x512xi32>
    %18 = arith.cmpi slt, %12, %17 : vector<1x512xi32>
    %19 = arith.extui %18 : vector<1x512xi1> to vector<1x512xi32>
    %20 = arith.sitofp %19 : vector<1x512xi32> to vector<1x512xf32>
    %c0_11 = arith.constant 0 : index
    %c0_12 = arith.constant 0 : index
    %c0_13 = arith.constant 0 : index
    %c0_14 = arith.constant 0 : index
    %21 = vector.load %arg3[%c0_11, %c0_12, %c0_13, %c0_14] : memref<1x1x2x512xf32, #tpu.memory_space<vmem>>, vector<1x1x2x512xf32>
    %22 = vector.shape_cast %21 : vector<1x1x2x512xf32> to vector<2x512xf32>
    %23 = vector.extract_strided_slice %22 {offsets = [0, 0], sizes = [1, 512], strides = [1, 1]} : vector<2x512xf32> to vector<1x512xf32>
    %c0_15 = arith.constant 0 : index
    %c0_16 = arith.constant 0 : index
    %24 = vector.load %arg7[%c0_15, %c0_16] : memref<18x512xf32, #tpu.memory_space<vmem>>, vector<1x512xf32>
    tpu.vector_store %arg7[%c0_15, %c0_16], %23 {strides = array<i32>} : memref<18x512xf32, #tpu.memory_space<vmem>>, vector<1x512xf32>,
    %c0_17 = arith.constant 0 : index
    %c0_18 = arith.constant 0 : index
    %c0_19 = arith.constant 0 : index
    %25 = vector.load %arg2[%c0_17, %c0_18, %c0_19] : memref<1x16x512xf32, #tpu.memory_space<vmem>>, vector<1x16x512xf32>
    %26 = vector.shape_cast %25 : vector<1x16x512xf32> to vector<16x512xf32>
    %c1_20 = arith.constant 1 : index
    %c0_21 = arith.constant 0 : index
    %27 = vector.load %arg7[%c1_20, %c0_21] : memref<18x512xf32, #tpu.memory_space<vmem>>, vector<16x512xf32>
    tpu.vector_store %arg7[%c1_20, %c0_21], %26 {strides = array<i32>} : memref<18x512xf32, #tpu.memory_space<vmem>>, vector<16x512xf32>,
    %28 = vector.extract_strided_slice %22 {offsets = [1, 0], sizes = [1, 512], strides = [1, 1]} : vector<2x512xf32> to vector<1x512xf32>
    %c17 = arith.constant 17 : index
    %c0_22 = arith.constant 0 : index
    %29 = vector.load %arg7[%c17, %c0_22] : memref<18x512xf32, #tpu.memory_space<vmem>>, vector<1x512xf32>
    tpu.vector_store %arg7[%c17, %c0_22], %28 {strides = array<i32>} : memref<18x512xf32, #tpu.memory_space<vmem>>, vector<1x512xf32>,
    %c0_23 = arith.constant 0 : index
    %c0_24 = arith.constant 0 : index
    %30 = vector.load %arg7[%c0_23, %c0_24] : memref<18x512xf32, #tpu.memory_space<vmem>>, vector<16x512xf32>
    %c1_25 = arith.constant 1 : index
    %c0_26 = arith.constant 0 : index
    %31 = vector.load %arg7[%c1_25, %c0_26] : memref<18x512xf32, #tpu.memory_space<vmem>>, vector<16x512xf32>
    %c2_27 = arith.constant 2 : index
    %c0_28 = arith.constant 0 : index
    %32 = vector.load %arg7[%c2_27, %c0_28] : memref<18x512xf32, #tpu.memory_space<vmem>>, vector<16x512xf32>
    %33 = vector.broadcast %0 : vector<1x512xf32> to vector<16x512xf32>
    %34 = arith.mulf %30, %33 : vector<16x512xf32>
    %35 = vector.broadcast %3 : vector<1x512xf32> to vector<16x512xf32>
    %36 = arith.mulf %31, %35 : vector<16x512xf32>
    %37 = arith.addf %34, %36 : vector<16x512xf32>
    %38 = vector.broadcast %6 : vector<1x512xf32> to vector<16x512xf32>
    %39 = arith.mulf %32, %38 : vector<16x512xf32>
    %40 = arith.addf %37, %39 : vector<16x512xf32>
    %41 = vector.broadcast %1 : vector<1x512xf32> to vector<16x512xf32>
    %42 = arith.mulf %30, %41 : vector<16x512xf32>
    %43 = vector.broadcast %4 : vector<1x512xf32> to vector<16x512xf32>
    %44 = arith.mulf %31, %43 : vector<16x512xf32>
    %45 = arith.addf %42, %44 : vector<16x512xf32>
    %46 = vector.broadcast %7 : vector<1x512xf32> to vector<16x512xf32>
    %47 = arith.mulf %32, %46 : vector<16x512xf32>
    %48 = arith.addf %45, %47 : vector<16x512xf32>
    %49 = vector.broadcast %2 : vector<1x512xf32> to vector<16x512xf32>
    %50 = arith.mulf %30, %49 : vector<16x512xf32>
    %51 = vector.broadcast %5 : vector<1x512xf32> to vector<16x512xf32>
    %52 = arith.mulf %31, %51 : vector<16x512xf32>
    %53 = arith.addf %50, %52 : vector<16x512xf32>
    %54 = vector.broadcast %8 : vector<1x512xf32> to vector<16x512xf32>
    %55 = arith.mulf %32, %54 : vector<16x512xf32>
    %56 = arith.addf %53, %55 : vector<16x512xf32>
    %57 = arith.addf %11, %48 : vector<16x512xf32>
    %c32_i32_29 = arith.constant 32 : i32
    %58 = tpu.dynamic_rotate %40 by %c32_i32_29 dim 1 : vector<16x512xf32>, i32 -> vector<16x512xf32>
    %59 = vector.broadcast %16 : vector<1x512xf32> to vector<16x512xf32>
    %60 = arith.mulf %59, %58 : vector<16x512xf32>
    %61 = arith.addf %57, %60 : vector<16x512xf32>
    %c480_i32_30 = arith.constant 480 : i32
    %62 = tpu.dynamic_rotate %56 by %c480_i32_30 dim 1 : vector<16x512xf32>, i32 -> vector<16x512xf32>
    %63 = vector.broadcast %20 : vector<1x512xf32> to vector<16x512xf32>
    %64 = arith.mulf %63, %62 : vector<16x512xf32>
    %65 = arith.addf %61, %64 : vector<16x512xf32>
    %c0_31 = arith.constant 0 : index
    %c0_32 = arith.constant 0 : index
    %c0_33 = arith.constant 0 : index
    %66 = vector.load %arg6[%c0_31, %c0_32, %c0_33] : memref<1x16x512xf32, #tpu.memory_space<vmem>>, vector<1x16x512xf32>
    %67 = vector.shape_cast %66 : vector<1x16x512xf32> to vector<16x512xf32>
    %68 = vector.shape_cast %65 : vector<16x512xf32> to vector<1x16x512xf32>
    tpu.vector_store %arg6[%c0_31, %c0_32, %c0_33], %68 {strides = array<i32>} : memref<1x16x512xf32, #tpu.memory_space<vmem>>, vector<1x16x512xf32>,
    return
  }
  func.func @transform_0(%arg0: i32, %arg1: i32) -> (i32, i32, i32) {
    %c0_i32 = arith.constant 0 : i32
    %c0_i32_0 = arith.constant 0 : i32
    return %arg0, %arg1, %c0_i32 : i32, i32, i32
  }
  func.func @transform_1(%arg0: i32, %arg1: i32) -> (i32, i32, i32, i32) {
    %c0_i32 = arith.constant 0 : i32
    %c0_i32_0 = arith.constant 0 : i32
    %c0_i32_1 = arith.constant 0 : i32
    return %arg0, %arg1, %c0_i32, %c0_i32_0 : i32, i32, i32, i32
  }
  func.func @transform_2(%arg0: i32, %arg1: i32) -> (i32, i32) {
    %c0_i32 = arith.constant 0 : i32
    %c0_i32_0 = arith.constant 0 : i32
    %c0_i32_1 = arith.constant 0 : i32
    return %c0_i32, %c0_i32_0 : i32, i32
  }
  func.func @transform_3(%arg0: i32, %arg1: i32) -> (i32, i32) {
    %c0_i32 = arith.constant 0 : i32
    %c0_i32_0 = arith.constant 0 : i32
    %c0_i32_1 = arith.constant 0 : i32
    return %c0_i32, %c0_i32_0 : i32, i32
  }
  func.func @transform_4(%arg0: i32, %arg1: i32) -> (i32, i32, i32) {
    %c0_i32 = arith.constant 0 : i32
    %c0_i32_0 = arith.constant 0 : i32
    return %arg0, %arg1, %c0_i32 : i32, i32, i32
  }
}

</mosaic_0001>

<llo_original>
// kernel: tpu_custom_call.1
$region0: #{tpu_custom_call.1}
  #allocation0 [shape = 'u32[]', space=smem, size = 0x4, offset = 0x4, fixed_abs, tag = 'smem constant byte address 0x4 - core index']
  #allocation1 [shape = 'u32[144,128]{1,0:T(1,128)}', space=vmem, size = 0x12000, scoped, tag = 'internal scratch']
  #allocation2 [shape = 'f32[18,512]{1,0:T(8,128)}', space=vmem, size = 0xc000, scoped, tag = 'scratch operand']
  %s0 = inlined_call_operand.hbm [shape: f32[2,16,512], index: 0, kind: input, shape index: {}]
  %s1 = inlined_call_operand.hbm [shape: f32[2,1,2,512], index: 1, kind: input, shape index: {}]
  %s2 = inlined_call_operand.hbm [shape: f32[9,512], index: 2, kind: input, shape index: {}]
  %s3 = inlined_call_operand.vmem [shape: f32[1,512], index: 3, kind: input, shape index: {}]
  %s4 = inlined_call_operand.hbm [shape: f32[2,16,512], index: 4, kind: output, shape index: {}]
  %s5 = sld [smem:[#allocation0]]
  $region61: #{tpu_custom_call.1} parent=0
    _
  %s7 = ssub.s32 1, %s5
  %s8 = scalar_select 0, %s7, %s5
  $region1: #{tpu_custom_call.1} parent=0
    #allocation3 [shape = 'u8[65536]{0}', space=vmem, size = 0x10000, scoped, tag = 'input window, operand 0']
    #allocation4 [shape = 's32[2]{0}', space=sflag, size = 0x8, scoped, tag = 'scoped memory for tpu_custom_call.1']
    #allocation5 [shape = 's32[2]{0}', space=sflag, size = 0x8, scoped, tag = 'scoped memory for tpu_custom_call.1']
    #allocation6 [shape = 'u8[8192]{0}', space=vmem, size = 0x2000, scoped, tag = 'input window, operand 1']
    #allocation7 [shape = 's32[2]{0}', space=sflag, size = 0x8, scoped, tag = 'scoped memory for tpu_custom_call.1']
    #allocation8 [shape = 'u8[32768]{0}', space=vmem, size = 0x8000, scoped, tag = 'input window, operand 2, single buffered']
    #allocation9 [shape = 'u8[65536]{0}', space=vmem, size = 0x10000, scoped, tag = 'output window, operand 0']
    %9 = vsyncpa [#allocation4], 0
    %s10 = scalar_lea.sflag [#allocation4], 1
    %11 = vsyncpa %s10, 0
    %12 = vsyncpa [#allocation7], 0
    %s13 = scalar_lea.sflag [#allocation7], 1
    %14 = vsyncpa %s13, 0
    %15 = vsyncpa [#allocation5], 0
    %s16 = scalar_lea.sflag [#allocation5], 1
    %17 = vsyncpa %s16, 0
    loop: start=0, step=1, limit=4
    $region2: #{tpu_custom_call.1} parent=1 // loop_pre_header
      _
    $region3: #{tpu_custom_call.1} parent=1 // loop_header
      %s19 = sphi 0, %s23
      %p20 = scmp.ge.s32.totalorder %s19, 4
      %s26 = sphi 0, %s38
      %s27 = sphi 0, %s34
      %s28 = sphi 0, %s26
      %s29 = sphi 0, %s27
      %s30 = sphi 0, %s28
      %s31 = sphi 0, %s29
      %s43 = sphi 0, %s45
      %s46 = sphi 0, %s43
      %s47 = sphi 0, %s46
      %s63 = sphi 0, %s47
      %s71 = sphi 0, %s73
      %s74 = sphi 0, %s71
      %s75 = sphi 0, %s74
      %s91 = sphi 0, %s75
      %s95 = sphi 0, %s95
      %s97 = sphi 0, %s95
      %s98 = sphi 0, %s97
      %s112 = sphi 0, %s98
      %s116 = sphi 0, %s116
      %s118 = sphi 0, %s116
      %s119 = sphi 0, %s118
      %s133 = sphi 0, %s119
      %s141 = sphi 0, %s143
      %s144 = sphi 0, %s141
      %s145 = sphi 0, %s144
      %s161 = sphi 0, %s145
    $region4: #{tpu_custom_call.1} parent=1 // loop_header_branch
      %22 = sbr.rel (%p20) target = $region8
    $region5: #{tpu_custom_call.1} parent=1 // loop_body
      %s24 = ssub.s32 %s19, 1
      %s25 = ssub.s32 %s19, 2
      %s32 = sadd.s32 1, %s27
      %p33 = scmp.ge.s32.totalorder %s32, 1
      %s34 = scalar_select %p33, 0, %s32
      %s35 = sadd.s32 1, %s26
      %s36 = scalar_select %p33, %s35, %s26
      %p37 = scmp.ge.s32.totalorder %s36, 2
      %s38 = scalar_select %p37, 0, %s36
      %s39 = ssub.s32 %s26, %s38
      %s40 = ssub.s32 %s27, %s34
      %s41 = sor.u32 %s39, %s40
      %p42 = scmp.eq.s32.totalorder %s41, 0
      %s44 = sadd.s32 %s43, 1
      %s45 = scalar_select %p42, %s43, %s44
      %p48 = pneg %p42
      %p49 = scmp.eq.s32.totalorder %s19, 1
      %p50 = por %p48, %p49
      %p51 = scmp.ne.s32.totalorder %s43, %s46
      %p52 = scmp.eq.s32.totalorder %s19, 0
      %p53 = por %p51, %p52
      %p54 = scmp.ne.s32.totalorder %s43, %s46
      %p55 = scmp.eq.s32.totalorder %s24, 1
      %p56 = por %p54, %p55
      %p57 = scmp.ne.s32.totalorder %s46, %s47
      %p58 = scmp.eq.s32.totalorder %s24, 0
      %p59 = por %p57, %p58
      %p60 = scmp.ne.s32.totalorder %s46, %s47
      %p61 = scmp.eq.s32.totalorder %s25, 1
      %p62 = por %p60, %p61
      %p64 = scmp.ne.s32.totalorder %s47, %s63
      %p65 = scmp.eq.s32.totalorder %s25, 0
      %p66 = por %p64, %p65
      %s67 = ssub.s32 %s26, %s38
      %s68 = ssub.s32 %s27, %s34
      %s69 = sor.u32 %s67, %s68
      %p70 = scmp.eq.s32.totalorder %s69, 0
      %s72 = sadd.s32 %s71, 1
      %s73 = scalar_select %p70, %s71, %s72
      %p76 = pneg %p70
      %p77 = scmp.eq.s32.totalorder %s19, 1
      %p78 = por %p76, %p77
      %p79 = scmp.ne.s32.totalorder %s71, %s74
      %p80 = scmp.eq.s32.totalorder %s19, 0
      %p81 = por %p79, %p80
      %p82 = scmp.ne.s32.totalorder %s71, %s74
      %p83 = scmp.eq.s32.totalorder %s24, 1
      %p84 = por %p82, %p83
      %p85 = scmp.ne.s32.totalorder %s74, %s75
      %p86 = scmp.eq.s32.totalorder %s24, 0
      %p87 = por %p85, %p86
      %p88 = scmp.ne.s32.totalorder %s74, %s75
      %p89 = scmp.eq.s32.totalorder %s25, 1
      %p90 = por %p88, %p89
      %p92 = scmp.ne.s32.totalorder %s75, %s91
      %p93 = scmp.eq.s32.totalorder %s25, 0
      %p94 = por %p92, %p93
      %s96 = sadd.s32 %s95, 1
      %p99 = scmp.eq.s32.totalorder %s19, 1
      %p100 = scmp.ne.s32.totalorder %s95, %s97
      %p101 = scmp.eq.s32.totalorder %s19, 0
      %p102 = por %p100, %p101
      %p103 = scmp.ne.s32.totalorder %s95, %s97
      %p104 = scmp.eq.s32.totalorder %s24, 1
      %p105 = por %p103, %p104
      %p106 = scmp.ne.s32.totalorder %s97, %s98
      %p107 = scmp.eq.s32.totalorder %s24, 0
      %p108 = por %p106, %p107
      %p109 = scmp.ne.s32.totalorder %s97, %s98
      %p110 = scmp.eq.s32.totalorder %s25, 1
      %p111 = por %p109, %p110
      %p113 = scmp.ne.s32.totalorder %s98, %s112
      %p114 = scmp.eq.s32.totalorder %s25, 0
      %p115 = por %p113, %p114
      %s117 = sadd.s32 %s116, 1
      %p120 = scmp.eq.s32.totalorder %s19, 1
      %p121 = scmp.ne.s32.totalorder %s116, %s118
      %p122 = scmp.eq.s32.totalorder %s19, 0
      %p123 = por %p121, %p122
      %p124 = scmp.ne.s32.totalorder %s116, %s118
      %p125 = scmp.eq.s32.totalorder %s24, 1
      %p126 = por %p124, %p125
      %p127 = scmp.ne.s32.totalorder %s118, %s119
      %p128 = scmp.eq.s32.totalorder %s24, 0
      %p129 = por %p127, %p128
      %p130 = scmp.ne.s32.totalorder %s118, %s119
      %p131 = scmp.eq.s32.totalorder %s25, 1
      %p132 = por %p130, %p131
      %p134 = scmp.ne.s32.totalorder %s119, %s133
      %p135 = scmp.eq.s32.totalorder %s25, 0
      %p136 = por %p134, %p135
      %s137 = ssub.s32 %s26, %s38
      %s138 = ssub.s32 %s27, %s34
      %s139 = sor.u32 %s137, %s138
      %p140 = scmp.eq.s32.totalorder %s139, 0
      %s142 = sadd.s32 %s141, 1
      %s143 = scalar_select %p140, %s141, %s142
      %p146 = pneg %p140
      %p147 = scmp.eq.s32.totalorder %s19, 1
      %p148 = por %p146, %p147
      %p149 = scmp.ne.s32.totalorder %s141, %s144
      %p150 = scmp.eq.s32.totalorder %s19, 0
      %p151 = por %p149, %p150
      %p152 = scmp.ne.s32.totalorder %s141, %s144
      %p153 = scmp.eq.s32.totalorder %s24, 1
      %p154 = por %p152, %p153
      %p155 = scmp.ne.s32.totalorder %s144, %s145
      %p156 = scmp.eq.s32.totalorder %s24, 0
      %p157 = por %p155, %p156
      %p158 = scmp.ne.s32.totalorder %s144, %s145
      %p159 = scmp.eq.s32.totalorder %s25, 1
      %p160 = por %p158, %p159
      %p162 = scmp.ne.s32.totalorder %s145, %s161
      %p163 = scmp.eq.s32.totalorder %s25, 0
      %p164 = por %p162, %p163
      %p165 = scmp.le.s32.totalorder 1, %s19
      %p166 = scmp.lt.s32.totalorder %s19, 3
      %p167 = pnand %p165, %p166
      %p168 = pneg %p167
      // Predicated region
      $region9: #{tpu_custom_call.1} parent=5 // pred_check
        _
      $region10: #{tpu_custom_call.1} parent=5 // pred_check_branch
        %170 = sbr.rel (%p167) target = $region12
      $region11: #{tpu_custom_call.1} parent=5 // pred_region
        %s171 = ssub.s32 %s19, 1
        // Predicated region
        $region13: #{tpu_custom_call.1} parent=11 // pred_check
          %p172 = pneg %p108
        $region14: #{tpu_custom_call.1} parent=11 // pred_check_branch
          %174 = sbr.rel (%p172) target = $region16
        $region15: #{tpu_custom_call.1} parent=11 // pred_region
          %s176 = ssub.s32 1024, 1024
          %177 = vsyncadd [#allocation7], %s176
          %s178 = sshll.u32 [#allocation8], 4
          %s179 = int_to_ptr.vmem [resolvable:$true] %s178
          %184 = dma.hbm_to_vmem [thread:$0]  %s2, 1024, %s179, [#allocation7], 512, 512, 32
        $region16: #{tpu_custom_call.1} parent=11 // pred_fallthru
          _
        // Predicated region
        $region17: #{tpu_custom_call.1} parent=11 // pred_check
          %p185 = pneg %p129
        $region18: #{tpu_custom_call.1} parent=11 // pred_check_branch
          %187 = sbr.rel (%p185) target = $region20
        $region19: #{tpu_custom_call.1} parent=11 // pred_region
          _
        $region20: #{tpu_custom_call.1} parent=11 // pred_fallthru
          _
      $region12: #{tpu_custom_call.1} parent=5 // pred_fallthru
        _
      %p188 = scmp.lt.s32.totalorder %s19, 2
      // Predicated region
      $region21: #{tpu_custom_call.1} parent=5 // pred_check
        %p189 = pneg %p188
      $region22: #{tpu_custom_call.1} parent=5 // pred_check_branch
        %191 = sbr.rel (%p189) target = $region24
      $region23: #{tpu_custom_call.1} parent=5 // pred_region
        // Predicated region
        $region25: #{tpu_custom_call.1} parent=23 // pred_check
          %p192 = pneg %p53
        $region26: #{tpu_custom_call.1} parent=23 // pred_check_branch
          %194 = sbr.rel (%p192) target = $region28
        $region27: #{tpu_custom_call.1} parent=23 // pred_region
          %s195 = sand.u32 %s43, 1
          %s196 = scalar_lea.sflag [#allocation4], %s195
          %s197 = sand.u32 %s43, 1
          %s198 = smul.addr %s197, 64
          %s199 = scalar_lea.vmem [#allocation3], %s198
          %s200 = smul.u32 2, %s27
          %s202 = ssub.s32 1024, 1024
          %203 = vsyncadd %s196, %s202
          %s204 = smul.addr %s200, 4
          %s205 = smul.addr %s26, 8
          %s206 = sadd.s32 %s204, %s205
          %s207 = smul.addr %s206, 128
          %s208 = scalar_lea.hbm %s0, %s207
          %s209 = sshll.u32 %s199, 4
          %s210 = int_to_ptr.vmem [resolvable:$true] %s209
          %215 = dma.hbm_to_vmem [thread:$0]  %s208, 1024, %s210, %s196, 512, 512, 32
        $region28: #{tpu_custom_call.1} parent=23 // pred_fallthru
          _
        // Predicated region
        $region29: #{tpu_custom_call.1} parent=23 // pred_check
          %p216 = pneg %p81
        $region30: #{tpu_custom_call.1} parent=23 // pred_check_branch
          %218 = sbr.rel (%p216) target = $region32
        $region31: #{tpu_custom_call.1} parent=23 // pred_region
          %s219 = sand.u32 %s19, 1
          %s220 = scalar_lea.sflag [#allocation7], %s219
          %s221 = sand.u32 %s71, 1
          %s222 = smul.addr %s221, 8
          %s223 = scalar_lea.vmem [#allocation6], %s222
          %s225 = ssub.s32 128, 128
          %226 = vsyncadd %s220, %s225
          %s227 = smul.addr %s27, 4
          %s228 = smul.addr %s26, 4
          %s229 = sadd.s32 %s227, %s228
          %s230 = smul.addr %s229, 32
          %s231 = scalar_lea.hbm %s1, %s230
          %s233 = sshll.u32 %s223, 4
          %s234 = int_to_ptr.vmem [resolvable:$true] %s233
          %236 = dma.hbm_to_vmem [thread:$0]  %s231, 128, %s234, %s220
        $region32: #{tpu_custom_call.1} parent=23 // pred_fallthru
          _
      $region24: #{tpu_custom_call.1} parent=5 // pred_fallthru
        _
      %p237 = scmp.le.s32.totalorder 1, %s19
      %p238 = scmp.lt.s32.totalorder %s19, 3
      %p239 = pnand %p237, %p238
      %p240 = pneg %p239
      // Predicated region
      $region33: #{tpu_custom_call.1} parent=5 // pred_check
        _
      $region34: #{tpu_custom_call.1} parent=5 // pred_check_branch
        %242 = sbr.rel (%p239) target = $region36
      $region35: #{tpu_custom_call.1} parent=5 // pred_region
        %s243 = ssub.s32 %s19, 1
        %s244 = sand.u32 %s46, 1
        %s245 = scalar_lea.sflag [#allocation4], %s244
        %s246 = sand.u32 %s46, 1
        %s247 = smul.addr %s246, 64
        %s248 = scalar_lea.vmem [#allocation3], %s247
        // Predicated region
        $region37: #{tpu_custom_call.1} parent=35 // pred_check
          %p249 = pneg %p59
        $region38: #{tpu_custom_call.1} parent=35 // pred_check_branch
          %251 = sbr.rel (%p249) target = $region40
        $region39: #{tpu_custom_call.1} parent=35 // pred_region
          %252 = dma.done %s245, 1024
        $region40: #{tpu_custom_call.1} parent=35 // pred_fallthru
          _
        %s253 = sand.u32 %s24, 1
        %s254 = scalar_lea.sflag [#allocation7], %s253
        %s255 = sand.u32 %s74, 1
        %s256 = smul.addr %s255, 8
        %s257 = scalar_lea.vmem [#allocation6], %s256
        // Predicated region
        $region41: #{tpu_custom_call.1} parent=35 // pred_check
          %p258 = pneg %p87
        $region42: #{tpu_custom_call.1} parent=35 // pred_check_branch
          %260 = sbr.rel (%p258) target = $region44
        $region43: #{tpu_custom_call.1} parent=35 // pred_region
          %261 = dma.done %s254, 128
        $region44: #{tpu_custom_call.1} parent=35 // pred_fallthru
          _
        // Predicated region
        $region45: #{tpu_custom_call.1} parent=35 // pred_check
          %p262 = pneg %p108
        $region46: #{tpu_custom_call.1} parent=35 // pred_check_branch
          %264 = sbr.rel (%p262) target = $region48
        $region47: #{tpu_custom_call.1} parent=35 // pred_region
          %265 = dma.done [#allocation7], 1024
        $region48: #{tpu_custom_call.1} parent=35 // pred_fallthru
          _
        %s266 = sand.u32 %s46, 1
        %s267 = scalar_lea.sflag [#allocation4], %s266
        %s268 = sand.u32 %s46, 1
        %s269 = smul.addr %s268, 64
        %s270 = scalar_lea.vmem [#allocation3], %s269
        %p271 = pneg %p59
        %p272 = pneg %p56
        %s273 = sand.u32 %s24, 1
        %s274 = scalar_lea.sflag [#allocation7], %s273
        %s275 = sand.u32 %s74, 1
        %s276 = smul.addr %s275, 8
        %s277 = scalar_lea.vmem [#allocation6], %s276
        %p278 = pneg %p87
        %p279 = pneg %p84
        %p280 = pneg %p108
        %p281 = pneg %p105
        %p282 = pneg %p129
        %p283 = pneg %p126
        %p284 = pneg %p157
        %p285 = pneg %p154
        %s286 = sand.u32 %s144, 1
        %s287 = scalar_lea.sflag [#allocation5], %s286
        %s288 = sand.u32 %s144, 1
        %s289 = smul.addr %s288, 64
        %s290 = scalar_lea.vmem [#allocation9], %s289
        %s291 = smul.u32 2, %s29
        %s292 = smul.u32 2, %s29
        %v293 = vld [vmem:[#allocation8] ss:$8 sm:$0xf]
        %s294 = scalar_lea.vmem [#allocation8], 1
        %v295 = vld [vmem:[%s294] ss:$8 sm:$0xf]
        %s296 = scalar_lea.vmem [#allocation8], 2
        %v297 = vld [vmem:[%s296] ss:$8 sm:$0xf]
        %s298 = scalar_lea.vmem [#allocation8], 3
        %v299 = vld [vmem:[%s298] ss:$8 sm:$0xf]
        %s300 = scalar_lea.vmem [#allocation8], 4
        %v301 = vld [vmem:[%s300] ss:$8 sm:$0xf]
        %s302 = scalar_lea.vmem [#allocation8], 5
        %v303 = vld [vmem:[%s302] ss:$8 sm:$0xf]
        %s304 = scalar_lea.vmem [#allocation8], 6
        %v305 = vld [vmem:[%s304] ss:$8 sm:$0xf]
        %s306 = scalar_lea.vmem [#allocation8], 7
        %v307 = vld [vmem:[%s306] ss:$8 sm:$0xf]
        %s308 = scalar_lea.vmem [#allocation8], 32
        %v309 = vld [vmem:[%s308] ss:$8 sm:$0xf]
        %v310 = vld [vmem:[%s3] sm:$0xf]
        %v312 = vlaneseq
        %v313 = vshrl.u32 %v312, 7
        %v314 = vsub.s32 0, %v313
        %v315 = vrot.slane %v310, %v314
        %v316 = vlaneseq
        %v317 = vshrl.u32 %v316, 7
        %v318 = vsub.s32 1, %v317
        %v319 = vrot.slane %v310, %v318
        %v320 = vlaneseq
        %v321 = vshrl.u32 %v320, 7
        %v322 = vsub.s32 2, %v321
        %v323 = vrot.slane %v310, %v322
        %v324 = vlaneseq
        %v325 = vshrl.u32 %v324, 7
        %v326 = vsub.s32 3, %v325
        %v327 = vrot.slane %v310, %v326
        %v332 = vlaneseq
        %v333 = vand.u32 %v332, 127
        %v334 = vadd.s32 %v333, 128
        %v335 = vadd.s32 %v333, 256
        %v336 = vadd.s32 %v333, 384
        %vm337 = vcmp.ge.s32.totalorder %v333, 32
        %vm338 = vcmp.ge.s32.totalorder %v334, 32
        %vm339 = vcmp.ge.s32.totalorder %v335, 32
        %vm340 = vcmp.ge.s32.totalorder %v336, 32
        %v341 = vsel %vm337, 1, 0
        %v342 = vsel %vm338, 1, 0
        %v343 = vsel %vm339, 1, 0
        %v344 = vsel %vm340, 1, 0
        %v345 = vcvt.s32.f32 %v341
        %v346 = vcvt.s32.f32 %v342
        %v347 = vcvt.s32.f32 %v343
        %v348 = vcvt.s32.f32 %v344
        %vm349 = vcmp.lt.s32.totalorder %v333, 480
        %vm350 = vcmp.lt.s32.totalorder %v334, 480
        %vm351 = vcmp.lt.s32.totalorder %v335, 480
        %vm352 = vcmp.lt.s32.totalorder %v336, 480
        %v353 = vsel %vm349, 1, 0
        %v354 = vsel %vm350, 1, 0
        %v355 = vsel %vm351, 1, 0
        %v356 = vsel %vm352, 1, 0
        %v357 = vcvt.s32.f32 %v353
        %v358 = vcvt.s32.f32 %v354
        %v359 = vcvt.s32.f32 %v355
        %v360 = vcvt.s32.f32 %v356
        %v361 = vld [vmem:[%s257] sm:$0xff]
        %v364 = vunpack.c.l.s4 1966171168
        %v365 = vunpack.c.0.s8 %v364
        %v366 = vlaneseq
        %v367 = vshrl.u32 %v366, 7
        %v368 = vsub.s32 %v365, %v367
        %v369 = vrot.slane %v361, %v368
        %v371 = vlaneseq
        %vm372 = vcmp.ge.s32.totalorder %v371, 0
        %vm373 = vcmp.lt.s32.totalorder %v371, 512
        %vm374 = vmand %vm372, %vm373
        %375 = vst.msk [vmem:[#allocation2] ss:$8 sm:$0xf] %vm374, %v369
        %376 = vst.msk [vmem:[#allocation2] ss:$8 sm:$0x0] %vm374, %v369
        %v377 = vld [vmem:[%s248] sm:$0xff]
        %v378 = vld [vmem:[%s248 + $0x8] sm:$0xff]
        %v379 = vld [vmem:[%s248 + $0x10] sm:$0xff]
        %v380 = vld [vmem:[%s248 + $0x18] sm:$0xff]
        %v381 = vld [vmem:[%s248 + $0x20] sm:$0xff]
        %v382 = vld [vmem:[%s248 + $0x28] sm:$0xff]
        %v383 = vld [vmem:[%s248 + $0x30] sm:$0xff]
        %v384 = vld [vmem:[%s248 + $0x38] sm:$0xff]
        %vm393 = vcmask 1040384
        %v394 = vrot.slane %v377, 7
        %v395 = vrot.slane %v378, 7
        %v396 = vrot.slane %v379, 7
        %v397 = vrot.slane %v380, 7
        %v398 = vrot.slane %v381, 7
        %v399 = vsel %vm393, %v394, %v398
        %v400 = vrot.slane %v382, 7
        %v401 = vsel %vm393, %v395, %v400
        %v402 = vrot.slane %v383, 7
        %v403 = vsel %vm393, %v396, %v402
        %v404 = vrot.slane %v384, 7
        %v405 = vsel %vm393, %v397, %v404
        %418 = vst [vmem:[#allocation2] sm:$0xfe] %v394
        %419 = vst [vmem:[#allocation2 + $0x8] sm:$0xfe] %v395
        %420 = vst [vmem:[#allocation2 + $0x10] sm:$0xfe] %v396
        %421 = vst [vmem:[#allocation2 + $0x18] sm:$0xfe] %v397
        %422 = vst [vmem:[#allocation2 + $0x20] sm:$0xff] %v399
        %423 = vst [vmem:[#allocation2 + $0x28] sm:$0xff] %v401
        %424 = vst [vmem:[#allocation2 + $0x30] sm:$0xff] %v403
        %425 = vst [vmem:[#allocation2 + $0x38] sm:$0xff] %v405
        %426 = vst [vmem:[#allocation2 + $0x40] sm:$0x1] %v398
        %427 = vst [vmem:[#allocation2 + $0x48] sm:$0x1] %v400
        %428 = vst [vmem:[#allocation2 + $0x50] sm:$0x1] %v402
        %429 = vst [vmem:[#allocation2 + $0x58] sm:$0x1] %v404
        %v430 = vcombine.high %v369, %v369
        %s432 = scalar_lea.vmem [#allocation2], 65
        %433 = vst.msk [vmem:[%s432] ss:$8 sm:$0xf] %vm374, %v430
        %434 = vst.msk [vmem:[%s432] ss:$8 sm:$0x0] %vm374, %v430
        %v435 = vld [vmem:[#allocation2] sm:$0xff]
        %v436 = vld [vmem:[#allocation2 + $0x8] sm:$0xff]
        %v437 = vld [vmem:[#allocation2 + $0x10] sm:$0xff]
        %v438 = vld [vmem:[#allocation2 + $0x18] sm:$0xff]
        %v439 = vld [vmem:[#allocation2 + $0x20] sm:$0xff]
        %v440 = vld [vmem:[#allocation2 + $0x28] sm:$0xff]
        %v441 = vld [vmem:[#allocation2 + $0x30] sm:$0xff]
        %v442 = vld [vmem:[#allocation2 + $0x38] sm:$0xff]
        %v443 = vld [vmem:[#allocation2] sm:$0xfe]
        %v444 = vld [vmem:[#allocation2 + $0x8] sm:$0xfe]
        %v445 = vld [vmem:[#allocation2 + $0x10] sm:$0xfe]
        %v446 = vld [vmem:[#allocation2 + $0x18] sm:$0xfe]
        %v447 = vld [vmem:[#allocation2 + $0x40] sm:$0x1]
        %v448 = vld [vmem:[#allocation2 + $0x48] sm:$0x1]
        %v449 = vld [vmem:[#allocation2 + $0x50] sm:$0x1]
        %v450 = vld [vmem:[#allocation2 + $0x58] sm:$0x1]
        %v451 = vld [vmem:[#allocation2] sm:$0xfc]
        %v452 = vld [vmem:[#allocation2 + $0x8] sm:$0xfc]
        %v453 = vld [vmem:[#allocation2 + $0x10] sm:$0xfc]
        %v454 = vld [vmem:[#allocation2 + $0x18] sm:$0xfc]
        %v455 = vld [vmem:[#allocation2 + $0x40] sm:$0x3]
        %v456 = vld [vmem:[#allocation2 + $0x48] sm:$0x3]
        %v457 = vld [vmem:[#allocation2 + $0x50] sm:$0x3]
        %v458 = vld [vmem:[#allocation2 + $0x58] sm:$0x3]
        %v460 = vlaneseq
        %v461 = vshrl.u32 %v460, 7
        %v462 = vsub.s32 0, %v461
        %v463 = vrot.slane %v293, %v462
        %v464 = vlaneseq
        %v465 = vshrl.u32 %v464, 7
        %v466 = vsub.s32 1, %v465
        %v467 = vrot.slane %v293, %v466
        %v468 = vlaneseq
        %v469 = vshrl.u32 %v468, 7
        %v470 = vsub.s32 2, %v469
        %v471 = vrot.slane %v293, %v470
        %v472 = vlaneseq
        %v473 = vshrl.u32 %v472, 7
        %v474 = vsub.s32 3, %v473
        %v475 = vrot.slane %v293, %v474
        %v480 = vmul.f32 %v435, %v463
        %v481 = vmul.f32 %v436, %v467
        %v482 = vmul.f32 %v437, %v471
        %v483 = vmul.f32 %v438, %v475
        %v484 = vmul.f32 %v439, %v463
        %v485 = vmul.f32 %v440, %v467
        %v486 = vmul.f32 %v441, %v471
        %v487 = vmul.f32 %v442, %v475
        %v489 = vlaneseq
        %v490 = vshrl.u32 %v489, 7
        %v491 = vsub.s32 0, %v490
        %v492 = vrot.slane %v299, %v491
        %v493 = vlaneseq
        %v494 = vshrl.u32 %v493, 7
        %v495 = vsub.s32 1, %v494
        %v496 = vrot.slane %v299, %v495
        %v497 = vlaneseq
        %v498 = vshrl.u32 %v497, 7
        %v499 = vsub.s32 2, %v498
        %v500 = vrot.slane %v299, %v499
        %v501 = vlaneseq
        %v502 = vshrl.u32 %v501, 7
        %v503 = vsub.s32 3, %v502
        %v504 = vrot.slane %v299, %v503
        %v509 = vmul.f32 %v443, %v492
        %v510 = vmul.f32 %v444, %v496
        %v511 = vmul.f32 %v445, %v500
        %v512 = vmul.f32 %v446, %v504
        %v513 = vmul.f32 %v439, %v492
        %v514 = vmul.f32 %v440, %v496
        %v515 = vmul.f32 %v441, %v500
        %v516 = vmul.f32 %v442, %v504
        %v517 = vmul.f32 %v447, %v492
        %v518 = vmul.f32 %v448, %v496
        %v519 = vmul.f32 %v449, %v500
        %v520 = vmul.f32 %v450, %v504
        %vm533 = vcmask 1046528
        %v534 = vrot.slane %v509, 1
        %v535 = vrot.slane %v513, 1
        %v536 = vsel %vm533, %v534, %v535
        %v537 = vrot.slane %v510, 1
        %v538 = vrot.slane %v514, 1
        %v539 = vsel %vm533, %v537, %v538
        %v540 = vrot.slane %v511, 1
        %v541 = vrot.slane %v515, 1
        %v542 = vsel %vm533, %v540, %v541
        %v543 = vrot.slane %v512, 1
        %v544 = vrot.slane %v516, 1
        %v545 = vsel %vm533, %v543, %v544
        %v546 = vrot.slane %v517, 1
        %v547 = vsel %vm533, %v535, %v546
        %v548 = vrot.slane %v518, 1
        %v549 = vsel %vm533, %v538, %v548
        %v550 = vrot.slane %v519, 1
        %v551 = vsel %vm533, %v541, %v550
        %v552 = vrot.slane %v520, 1
        %v553 = vsel %vm533, %v544, %v552
        %v562 = vadd.f32 %v480, %v536
        %v563 = vadd.f32 %v481, %v539
        %v564 = vadd.f32 %v482, %v542
        %v565 = vadd.f32 %v483, %v545
        %v566 = vadd.f32 %v484, %v547
        %v567 = vadd.f32 %v485, %v549
        %v568 = vadd.f32 %v486, %v551
        %v569 = vadd.f32 %v487, %v553
        %v571 = vlaneseq
        %v572 = vshrl.u32 %v571, 7
        %v573 = vsub.s32 0, %v572
        %v574 = vrot.slane %v305, %v573
        %v575 = vlaneseq
        %v576 = vshrl.u32 %v575, 7
        %v577 = vsub.s32 1, %v576
        %v578 = vrot.slane %v305, %v577
        %v579 = vlaneseq
        %v580 = vshrl.u32 %v579, 7
        %v581 = vsub.s32 2, %v580
        %v582 = vrot.slane %v305, %v581
        %v583 = vlaneseq
        %v584 = vshrl.u32 %v583, 7
        %v585 = vsub.s32 3, %v584
        %v586 = vrot.slane %v305, %v585
        %v591 = vmul.f32 %v451, %v574
        %v592 = vmul.f32 %v452, %v578
        %v593 = vmul.f32 %v453, %v582
        %v594 = vmul.f32 %v454, %v586
        %v595 = vmul.f32 %v439, %v574
        %v596 = vmul.f32 %v440, %v578
        %v597 = vmul.f32 %v441, %v582
        %v598 = vmul.f32 %v442, %v586
        %v599 = vmul.f32 %v455, %v574
        %v600 = vmul.f32 %v456, %v578
        %v601 = vmul.f32 %v457, %v582
        %v602 = vmul.f32 %v458, %v586
        %vm615 = vcmask 1045504
        %v616 = vrot.slane %v591, 2
        %v617 = vrot.slane %v595, 2
        %v618 = vsel %vm615, %v616, %v617
        %v619 = vrot.slane %v592, 2
        %v620 = vrot.slane %v596, 2
        %v621 = vsel %vm615, %v619, %v620
        %v622 = vrot.slane %v593, 2
        %v623 = vrot.slane %v597, 2
        %v624 = vsel %vm615, %v622, %v623
        %v625 = vrot.slane %v594, 2
        %v626 = vrot.slane %v598, 2
        %v627 = vsel %vm615, %v625, %v626
        %v628 = vrot.slane %v599, 2
        %v629 = vsel %vm615, %v617, %v628
        %v630 = vrot.slane %v600, 2
        %v631 = vsel %vm615, %v620, %v630
        %v632 = vrot.slane %v601, 2
        %v633 = vsel %vm615, %v623, %v632
        %v634 = vrot.slane %v602, 2
        %v635 = vsel %vm615, %v626, %v634
        %v644 = vadd.f32 %v562, %v618
        %v645 = vadd.f32 %v563, %v621
        %v646 = vadd.f32 %v564, %v624
        %v647 = vadd.f32 %v565, %v627
        %v648 = vadd.f32 %v566, %v629
        %v649 = vadd.f32 %v567, %v631
        %v650 = vadd.f32 %v568, %v633
        %v651 = vadd.f32 %v569, %v635
        %v653 = vlaneseq
        %v654 = vshrl.u32 %v653, 7
        %v655 = vsub.s32 0, %v654
        %v656 = vrot.slane %v295, %v655
        %v657 = vlaneseq
        %v658 = vshrl.u32 %v657, 7
        %v659 = vsub.s32 1, %v658
        %v660 = vrot.slane %v295, %v659
        %v661 = vlaneseq
        %v662 = vshrl.u32 %v661, 7
        %v663 = vsub.s32 2, %v662
        %v664 = vrot.slane %v295, %v663
        %v665 = vlaneseq
        %v666 = vshrl.u32 %v665, 7
        %v667 = vsub.s32 3, %v666
        %v668 = vrot.slane %v295, %v667
        %v673 = vmul.f32 %v435, %v656
        %v674 = vmul.f32 %v436, %v660
        %v675 = vmul.f32 %v437, %v664
        %v676 = vmul.f32 %v438, %v668
        %v677 = vmul.f32 %v439, %v656
        %v678 = vmul.f32 %v440, %v660
        %v679 = vmul.f32 %v441, %v664
        %v680 = vmul.f32 %v442, %v668
        %v682 = vlaneseq
        %v683 = vshrl.u32 %v682, 7
        %v684 = vsub.s32 0, %v683
        %v685 = vrot.slane %v301, %v684
        %v686 = vlaneseq
        %v687 = vshrl.u32 %v686, 7
        %v688 = vsub.s32 1, %v687
        %v689 = vrot.slane %v301, %v688
        %v690 = vlaneseq
        %v691 = vshrl.u32 %v690, 7
        %v692 = vsub.s32 2, %v691
        %v693 = vrot.slane %v301, %v692
        %v694 = vlaneseq
        %v695 = vshrl.u32 %v694, 7
        %v696 = vsub.s32 3, %v695
        %v697 = vrot.slane %v301, %v696
        %v702 = vmul.f32 %v443, %v685
        %v703 = vmul.f32 %v444, %v689
        %v704 = vmul.f32 %v445, %v693
        %v705 = vmul.f32 %v446, %v697
        %v706 = vmul.f32 %v439, %v685
        %v707 = vmul.f32 %v440, %v689
        %v708 = vmul.f32 %v441, %v693
        %v709 = vmul.f32 %v442, %v697
        %v710 = vmul.f32 %v447, %v685
        %v711 = vmul.f32 %v448, %v689
        %v712 = vmul.f32 %v449, %v693
        %v713 = vmul.f32 %v450, %v697
        %v726 = vrot.slane %v702, 1
        %v727 = vrot.slane %v706, 1
        %v728 = vsel %vm533, %v726, %v727
        %v729 = vrot.slane %v703, 1
        %v730 = vrot.slane %v707, 1
        %v731 = vsel %vm533, %v729, %v730
        %v732 = vrot.slane %v704, 1
        %v733 = vrot.slane %v708, 1
        %v734 = vsel %vm533, %v732, %v733
        %v735 = vrot.slane %v705, 1
        %v736 = vrot.slane %v709, 1
        %v737 = vsel %vm533, %v735, %v736
        %v738 = vrot.slane %v710, 1
        %v739 = vsel %vm533, %v727, %v738
        %v740 = vrot.slane %v711, 1
        %v741 = vsel %vm533, %v730, %v740
        %v742 = vrot.slane %v712, 1
        %v743 = vsel %vm533, %v733, %v742
        %v744 = vrot.slane %v713, 1
        %v745 = vsel %vm533, %v736, %v744
        %v754 = vadd.f32 %v673, %v728
        %v755 = vadd.f32 %v674, %v731
        %v756 = vadd.f32 %v675, %v734
        %v757 = vadd.f32 %v676, %v737
        %v758 = vadd.f32 %v677, %v739
        %v759 = vadd.f32 %v678, %v741
        %v760 = vadd.f32 %v679, %v743
        %v761 = vadd.f32 %v680, %v745
        %v763 = vlaneseq
        %v764 = vshrl.u32 %v763, 7
        %v765 = vsub.s32 0, %v764
        %v766 = vrot.slane %v307, %v765
        %v767 = vlaneseq
        %v768 = vshrl.u32 %v767, 7
        %v769 = vsub.s32 1, %v768
        %v770 = vrot.slane %v307, %v769
        %v771 = vlaneseq
        %v772 = vshrl.u32 %v771, 7
        %v773 = vsub.s32 2, %v772
        %v774 = vrot.slane %v307, %v773
        %v775 = vlaneseq
        %v776 = vshrl.u32 %v775, 7
        %v777 = vsub.s32 3, %v776
        %v778 = vrot.slane %v307, %v777
        %v783 = vmul.f32 %v451, %v766
        %v784 = vmul.f32 %v452, %v770
        %v785 = vmul.f32 %v453, %v774
        %v786 = vmul.f32 %v454, %v778
        %v787 = vmul.f32 %v439, %v766
        %v788 = vmul.f32 %v440, %v770
        %v789 = vmul.f32 %v441, %v774
        %v790 = vmul.f32 %v442, %v778
        %v791 = vmul.f32 %v455, %v766
        %v792 = vmul.f32 %v456, %v770
        %v793 = vmul.f32 %v457, %v774
        %v794 = vmul.f32 %v458, %v778
        %v807 = vrot.slane %v783, 2
        %v808 = vrot.slane %v787, 2
        %v809 = vsel %vm615, %v807, %v808
        %v810 = vrot.slane %v784, 2
        %v811 = vrot.slane %v788, 2
        %v812 = vsel %vm615, %v810, %v811
        %v813 = vrot.slane %v785, 2
        %v814 = vrot.slane %v789, 2
        %v815 = vsel %vm615, %v813, %v814
        %v816 = vrot.slane %v786, 2
        %v817 = vrot.slane %v790, 2
        %v818 = vsel %vm615, %v816, %v817
        %v819 = vrot.slane %v791, 2
        %v820 = vsel %vm615, %v808, %v819
        %v821 = vrot.slane %v792, 2
        %v822 = vsel %vm615, %v811, %v821
        %v823 = vrot.slane %v793, 2
        %v824 = vsel %vm615, %v814, %v823
        %v825 = vrot.slane %v794, 2
        %v826 = vsel %vm615, %v817, %v825
        %v835 = vadd.f32 %v754, %v809
        %v836 = vadd.f32 %v755, %v812
        %v837 = vadd.f32 %v756, %v815
        %v838 = vadd.f32 %v757, %v818
        %v839 = vadd.f32 %v758, %v820
        %v840 = vadd.f32 %v759, %v822
        %v841 = vadd.f32 %v760, %v824
        %v842 = vadd.f32 %v761, %v826
        %v844 = vlaneseq
        %v845 = vshrl.u32 %v844, 7
        %v846 = vsub.s32 0, %v845
        %v847 = vrot.slane %v297, %v846
        %v848 = vlaneseq
        %v849 = vshrl.u32 %v848, 7
        %v850 = vsub.s32 1, %v849
        %v851 = vrot.slane %v297, %v850
        %v852 = vlaneseq
        %v853 = vshrl.u32 %v852, 7
        %v854 = vsub.s32 2, %v853
        %v855 = vrot.slane %v297, %v854
        %v856 = vlaneseq
        %v857 = vshrl.u32 %v856, 7
        %v858 = vsub.s32 3, %v857
        %v859 = vrot.slane %v297, %v858
        %v864 = vmul.f32 %v435, %v847
        %v865 = vmul.f32 %v436, %v851
        %v866 = vmul.f32 %v437, %v855
        %v867 = vmul.f32 %v438, %v859
        %v868 = vmul.f32 %v439, %v847
        %v869 = vmul.f32 %v440, %v851
        %v870 = vmul.f32 %v441, %v855
        %v871 = vmul.f32 %v442, %v859
        %v873 = vlaneseq
        %v874 = vshrl.u32 %v873, 7
        %v875 = vsub.s32 0, %v874
        %v876 = vrot.slane %v303, %v875
        %v877 = vlaneseq
        %v878 = vshrl.u32 %v877, 7
        %v879 = vsub.s32 1, %v878
        %v880 = vrot.slane %v303, %v879
        %v881 = vlaneseq
        %v882 = vshrl.u32 %v881, 7
        %v883 = vsub.s32 2, %v882
        %v884 = vrot.slane %v303, %v883
        %v885 = vlaneseq
        %v886 = vshrl.u32 %v885, 7
        %v887 = vsub.s32 3, %v886
        %v888 = vrot.slane %v303, %v887
        %v893 = vmul.f32 %v443, %v876
        %v894 = vmul.f32 %v444, %v880
        %v895 = vmul.f32 %v445, %v884
        %v896 = vmul.f32 %v446, %v888
        %v897 = vmul.f32 %v439, %v876
        %v898 = vmul.f32 %v440, %v880
        %v899 = vmul.f32 %v441, %v884
        %v900 = vmul.f32 %v442, %v888
        %v901 = vmul.f32 %v447, %v876
        %v902 = vmul.f32 %v448, %v880
        %v903 = vmul.f32 %v449, %v884
        %v904 = vmul.f32 %v450, %v888
        %v917 = vrot.slane %v893, 1
        %v918 = vrot.slane %v897, 1
        %v919 = vsel %vm533, %v917, %v918
        %v920 = vrot.slane %v894, 1
        %v921 = vrot.slane %v898, 1
        %v922 = vsel %vm533, %v920, %v921
        %v923 = vrot.slane %v895, 1
        %v924 = vrot.slane %v899, 1
        %v925 = vsel %vm533, %v923, %v924
        %v926 = vrot.slane %v896, 1
        %v927 = vrot.slane %v900, 1
        %v928 = vsel %vm533, %v926, %v927
        %v929 = vrot.slane %v901, 1
        %v930 = vsel %vm533, %v918, %v929
        %v931 = vrot.slane %v902, 1
        %v932 = vsel %vm533, %v921, %v931
        %v933 = vrot.slane %v903, 1
        %v934 = vsel %vm533, %v924, %v933
        %v935 = vrot.slane %v904, 1
        %v936 = vsel %vm533, %v927, %v935
        %v945 = vadd.f32 %v864, %v919
        %v946 = vadd.f32 %v865, %v922
        %v947 = vadd.f32 %v866, %v925
        %v948 = vadd.f32 %v867, %v928
        %v949 = vadd.f32 %v868, %v930
        %v950 = vadd.f32 %v869, %v932
        %v951 = vadd.f32 %v870, %v934
        %v952 = vadd.f32 %v871, %v936
        %v954 = vlaneseq
        %v955 = vshrl.u32 %v954, 7
        %v956 = vsub.s32 0, %v955
        %v957 = vrot.slane %v309, %v956
        %v958 = vlaneseq
        %v959 = vshrl.u32 %v958, 7
        %v960 = vsub.s32 1, %v959
        %v961 = vrot.slane %v309, %v960
        %v962 = vlaneseq
        %v963 = vshrl.u32 %v962, 7
        %v964 = vsub.s32 2, %v963
        %v965 = vrot.slane %v309, %v964
        %v966 = vlaneseq
        %v967 = vshrl.u32 %v966, 7
        %v968 = vsub.s32 3, %v967
        %v969 = vrot.slane %v309, %v968
        %v974 = vmul.f32 %v451, %v957
        %v975 = vmul.f32 %v452, %v961
        %v976 = vmul.f32 %v453, %v965
        %v977 = vmul.f32 %v454, %v969
        %v978 = vmul.f32 %v439, %v957
        %v979 = vmul.f32 %v440, %v961
        %v980 = vmul.f32 %v441, %v965
        %v981 = vmul.f32 %v442, %v969
        %v982 = vmul.f32 %v455, %v957
        %v983 = vmul.f32 %v456, %v961
        %v984 = vmul.f32 %v457, %v965
        %v985 = vmul.f32 %v458, %v969
        %v998 = vrot.slane %v974, 2
        %v999 = vrot.slane %v978, 2
        %v1000 = vsel %vm615, %v998, %v999
        %v1001 = vrot.slane %v975, 2
        %v1002 = vrot.slane %v979, 2
        %v1003 = vsel %vm615, %v1001, %v1002
        %v1004 = vrot.slane %v976, 2
        %v1005 = vrot.slane %v980, 2
        %v1006 = vsel %vm615, %v1004, %v1005
        %v1007 = vrot.slane %v977, 2
        %v1008 = vrot.slane %v981, 2
        %v1009 = vsel %vm615, %v1007, %v1008
        %v1010 = vrot.slane %v982, 2
        %v1011 = vsel %vm615, %v999, %v1010
        %v1012 = vrot.slane %v983, 2
        %v1013 = vsel %vm615, %v1002, %v1012
        %v1014 = vrot.slane %v984, 2
        %v1015 = vsel %vm615, %v1005, %v1014
        %v1016 = vrot.slane %v985, 2
        %v1017 = vsel %vm615, %v1008, %v1016
        %v1026 = vadd.f32 %v945, %v1000
        %v1027 = vadd.f32 %v946, %v1003
        %v1028 = vadd.f32 %v947, %v1006
        %v1029 = vadd.f32 %v948, %v1009
        %v1030 = vadd.f32 %v949, %v1011
        %v1031 = vadd.f32 %v950, %v1013
        %v1032 = vadd.f32 %v951, %v1015
        %v1033 = vadd.f32 %v952, %v1017
        %v1034 = vadd.f32 %v315, %v835
        %v1035 = vadd.f32 %v319, %v836
        %v1036 = vadd.f32 %v323, %v837
        %v1037 = vadd.f32 %v327, %v838
        %v1038 = vadd.f32 %v315, %v839
        %v1039 = vadd.f32 %v319, %v840
        %v1040 = vadd.f32 %v323, %v841
        %v1041 = vadd.f32 %v327, %v842
        %1042 = vrot.lane.b32.xlu0 %v644, 32
        %v1043 = vpop.permute.xlu0 %1042
        %1044 = vrot.lane.b32.xlu0 %v648, 32
        %v1045 = vpop.permute.xlu0 %1044
        %1046 = vrot.lane.b32.xlu0 %v645, 32
        %v1047 = vpop.permute.xlu0 %1046
        %1048 = vrot.lane.b32.xlu0 %v649, 32
        %v1049 = vpop.permute.xlu0 %1048
        %1050 = vrot.lane.b32.xlu0 %v646, 32
        %v1051 = vpop.permute.xlu0 %1050
        %1052 = vrot.lane.b32.xlu0 %v650, 32
        %v1053 = vpop.permute.xlu0 %1052
        %1054 = vrot.lane.b32.xlu0 %v647, 32
        %v1055 = vpop.permute.xlu0 %1054
        %1056 = vrot.lane.b32.xlu0 %v651, 32
        %v1057 = vpop.permute.xlu0 %1056
        %vm1058 = vcmp.lt.s32.totalorder %v333, 32
        %v1059 = vsel %vm1058, %v1051, %v1055
        %v1060 = vsel %vm1058, %v1053, %v1057
        %v1061 = vsel %vm1058, %v1047, %v1051
        %v1062 = vsel %vm1058, %v1049, %v1053
        %v1063 = vsel %vm1058, %v1043, %v1047
        %v1064 = vsel %vm1058, %v1045, %v1049
        %v1065 = vsel %vm1058, %v1055, %v1043
        %v1066 = vsel %vm1058, %v1057, %v1045
        %v1067 = vmul.f32 %v345, %v1065
        %v1068 = vmul.f32 %v346, %v1063
        %v1069 = vmul.f32 %v347, %v1061
        %v1070 = vmul.f32 %v348, %v1059
        %v1071 = vmul.f32 %v345, %v1066
        %v1072 = vmul.f32 %v346, %v1064
        %v1073 = vmul.f32 %v347, %v1062
        %v1074 = vmul.f32 %v348, %v1060
        %v1075 = vadd.f32 %v1034, %v1067
        %v1076 = vadd.f32 %v1035, %v1068
        %v1077 = vadd.f32 %v1036, %v1069
        %v1078 = vadd.f32 %v1037, %v1070
        %v1079 = vadd.f32 %v1038, %v1071
        %v1080 = vadd.f32 %v1039, %v1072
        %v1081 = vadd.f32 %v1040, %v1073
        %v1082 = vadd.f32 %v1041, %v1074
        %1083 = vrot.lane.b32.xlu0 %v1026, 96
        %v1084 = vpop.permute.xlu0 %1083
        %1085 = vrot.lane.b32.xlu0 %v1030, 96
        %v1086 = vpop.permute.xlu0 %1085
        %1087 = vrot.lane.b32.xlu0 %v1027, 96
        %v1088 = vpop.permute.xlu0 %1087
        %1089 = vrot.lane.b32.xlu0 %v1031, 96
        %v1090 = vpop.permute.xlu0 %1089
        %1091 = vrot.lane.b32.xlu0 %v1028, 96
        %v1092 = vpop.permute.xlu0 %1091
        %1093 = vrot.lane.b32.xlu0 %v1032, 96
        %v1094 = vpop.permute.xlu0 %1093
        %1095 = vrot.lane.b32.xlu0 %v1029, 96
        %v1096 = vpop.permute.xlu0 %1095
        %1097 = vrot.lane.b32.xlu0 %v1033, 96
        %v1098 = vpop.permute.xlu0 %1097
        %vm1099 = vcmp.lt.s32.totalorder %v333, 96
        %v1100 = vsel %vm1099, %v1092, %v1096
        %v1101 = vsel %vm1099, %v1094, %v1098
        %v1102 = vsel %vm1099, %v1088, %v1092
        %v1103 = vsel %vm1099, %v1090, %v1094
        %v1104 = vsel %vm1099, %v1084, %v1088
        %v1105 = vsel %vm1099, %v1086, %v1090
        %v1106 = vsel %vm1099, %v1096, %v1084
        %v1107 = vsel %vm1099, %v1098, %v1086
        %v1108 = vmul.f32 %v357, %v1104
        %v1109 = vmul.f32 %v358, %v1102
        %v1110 = vmul.f32 %v359, %v1100
        %v1111 = vmul.f32 %v360, %v1106
        %v1112 = vmul.f32 %v357, %v1105
        %v1113 = vmul.f32 %v358, %v1103
        %v1114 = vmul.f32 %v359, %v1101
        %v1115 = vmul.f32 %v360, %v1107
        %v1116 = vadd.f32 %v1075, %v1108
        %v1117 = vadd.f32 %v1076, %v1109
        %v1118 = vadd.f32 %v1077, %v1110
        %v1119 = vadd.f32 %v1078, %v1111
        %v1120 = vadd.f32 %v1079, %v1112
        %v1121 = vadd.f32 %v1080, %v1113
        %v1122 = vadd.f32 %v1081, %v1114
        %v1123 = vadd.f32 %v1082, %v1115
        %1124 = vst [vmem:[%s290] sm:$0xff] %v1116
        %1125 = vst [vmem:[%s290 + $0x8] sm:$0xff] %v1117
        %1126 = vst [vmem:[%s290 + $0x10] sm:$0xff] %v1118
        %1127 = vst [vmem:[%s290 + $0x18] sm:$0xff] %v1119
        %1128 = vst [vmem:[%s290 + $0x20] sm:$0xff] %v1120
        %1129 = vst [vmem:[%s290 + $0x28] sm:$0xff] %v1121
        %1130 = vst [vmem:[%s290 + $0x30] sm:$0xff] %v1122
        %1131 = vst [vmem:[%s290 + $0x38] sm:$0xff] %v1123
        %s1132 = sand.u32 %s144, 1
        %s1133 = scalar_lea.sflag [#allocation5], %s1132
        %s1134 = sand.u32 %s144, 1
        %s1135 = smul.addr %s1134, 64
        %s1136 = scalar_lea.vmem [#allocation9], %s1135
        // Predicated region
        $region49: #{tpu_custom_call.1} parent=35 // pred_check
          %p1137 = pneg %p154
        $region50: #{tpu_custom_call.1} parent=35 // pred_check_branch
          %1139 = sbr.rel (%p1137) target = $region52
        $region51: #{tpu_custom_call.1} parent=35 // pred_region
          %s1140 = smul.u32 2, %s29
          %s1142 = ssub.s32 1024, 1024
          %1143 = vsyncadd %s1133, %s1142
          %s1144 = smul.addr %s1140, 4
          %s1145 = smul.addr %s28, 8
          %s1146 = sadd.s32 %s1144, %s1145
          %s1147 = smul.addr %s1146, 128
          %s1148 = scalar_lea.hbm %s4, %s1147
          %s1149 = sshll.u32 %s1136, 4
          %s1150 = int_to_ptr.vmem [resolvable:$true] %s1149
          %1155 = dma.vmem_to_hbm [thread:$0]  %s1150, 1024, %s1148, %s1133, 512, 512, 32
        $region52: #{tpu_custom_call.1} parent=35 // pred_fallthru
          _
      $region36: #{tpu_custom_call.1} parent=5 // pred_fallthru
        _
      %p1156 = scmp.le.s32.totalorder 2, %s19
      // Predicated region
      $region53: #{tpu_custom_call.1} parent=5 // pred_check
        %p1157 = pneg %p1156
      $region54: #{tpu_custom_call.1} parent=5 // pred_check_branch
        %1159 = sbr.rel (%p1157) target = $region56
      $region55: #{tpu_custom_call.1} parent=5 // pred_region
        %s1160 = ssub.s32 %s19, 2
        // Predicated region
        $region57: #{tpu_custom_call.1} parent=55 // pred_check
          %p1161 = pneg %p160
        $region58: #{tpu_custom_call.1} parent=55 // pred_check_branch
          %1163 = sbr.rel (%p1161) target = $region60
        $region59: #{tpu_custom_call.1} parent=55 // pred_region
          %s1164 = sand.u32 %s145, 1
          %s1165 = scalar_lea.sflag [#allocation5], %s1164
          %s1166 = sand.u32 %s145, 1
          %s1167 = smul.addr %s1166, 64
          %s1168 = scalar_lea.vmem [#allocation9], %s1167
          %1169 = dma.done %s1165, 1024
        $region60: #{tpu_custom_call.1} parent=55 // pred_fallthru
          _
      $region56: #{tpu_custom_call.1} parent=5 // pred_fallthru
        _
    $region6: #{tpu_custom_call.1} parent=1 // loop_footer
      %s23 = sadd.s32 1, %s19
    $region7: #{tpu_custom_call.1} parent=1 // loop_footer_branch
      %18 = sbr.rel target = $region3
    $region8: #{tpu_custom_call.1} parent=1 // loop_exit
      _
    %1170 = vsyncpa [#allocation4], 1
    %s1171 = scalar_lea.sflag [#allocation4], 1
    %1172 = vsyncpa %s1171, 1
    %1173 = vsyncpa [#allocation7], 1
    %s1174 = scalar_lea.sflag [#allocation7], 1
    %1175 = vsyncpa %s1174, 1
    %1176 = vsyncpa [#allocation5], 1
    %s1177 = scalar_lea.sflag [#allocation5], 1
    %1178 = vsyncpa %s1177, 1

</llo_original>
